<compile_context>
chip_gen: v5e
topology: v5e:2x2
jax: 0.10.0
libtpu: 0.0.40
codegen_flags: <defaults>
</compile_context>

<pallas_src>
import functools

import jax
import jax.numpy as jnp
from jax import lax
from jax.experimental import pallas as pl
from jax.experimental.pallas import tpu as pltpu


def _stats_kernel(x_ref, sx_ref, sxx_ref, *, n: int, tile_n: int, ragged: bool):
    """Pass 1: accumulate per-batch-slice x-moments (sum_x, x @ x.T) over N."""
    j = pl.program_id(1)
    tb, c_in, tn = x_ref.shape

    @pl.when(j == 0)
    def _():
        sx_ref[...] = jnp.zeros_like(sx_ref)
        sxx_ref[...] = jnp.zeros_like(sxx_ref)

    if ragged:
        valid = n - j * tile_n  # >= tile_n for all but the last tile
        keep = lax.broadcasted_iota(jnp.int32, (c_in, tn), 1) < valid

    sx = jnp.zeros(sx_ref.shape, jnp.float32)
    sxx = jnp.zeros(sxx_ref.shape, jnp.float32)
    for bb in range(tb):  # tb is small and static
        xb = x_ref[bb].astype(jnp.float32)              # (c_in, tile_n)
        if ragged:
            xb = jnp.where(keep, xb, 0.0)               # zero garbage tail lanes
        sx = sx + jnp.sum(xb, axis=1, keepdims=True)    # (c_in, 1)
        sxx = sxx + lax.dot_general(                    # (c_in, c_in) on the MXU
            xb, xb, (((1,), (1,)), ((), ())),
            preferred_element_type=jnp.float32)
    sx_ref[...] += sx
    sxx_ref[...] += sxx


def _norm_kernel(x_ref, w_ref, scale_ref, shift_ref, o_ref, *, use_act: bool):
    """Pass 2: recompute y = W @ x per tile, apply fused per-channel FMA (+ReLU)."""
    tb = x_ref.shape[0]
    w = w_ref[...]                                       # (c_out, c_in) f32
    scale = scale_ref[...]                               # (c_out, 1)
    shift = shift_ref[...]                               # (c_out, 1)
    for bb in range(tb):  # tb is small and static
        xb = x_ref[bb].astype(jnp.float32)               # (c_in, tile_n)
        y = jnp.dot(w, xb, preferred_element_type=jnp.float32)  # (c_out, tile_n)
        h = y * scale + shift
        if use_act:
            h = jnp.maximum(h, 0.0)
        o_ref[bb] = h.astype(o_ref.dtype)


def _vmem_capacity_bytes() -> int:
    try:
        cap = int(pltpu.get_tpu_info().vmem_capacity_bytes)
        if cap > 0:
            return cap
    except Exception:
        pass
    return 64 * 1024 * 1024  # conservative default (v7x per-core VMEM)


def _largest_divisor_leq(x: int, cap: int) -> int:
    for d in range(max(1, min(x, cap)), 0, -1):
        if x % d == 0:
            return d
    return 1


def conv1d_block(x, weight, bias, gamma, beta, *, use_act=True, eps=1e-5):
    """Forward of CSDI Conv1d module.

    x      : (B, C_in, K, L)
    weight : (C_out, C_in, 1)   (kernel_size must be 1)
    bias   : (C_out,)           (unused: cancels exactly under training-mode BN)
    gamma  : (C_out,)           BN weight
    beta   : (C_out,)           BN bias
    returns (B, C_out, K, L)
    """
    del bias  # mathematically cancelled by BatchNorm mean subtraction
    b, c_in, k, l = x.shape
    c_out, c_in_w, ks = weight.shape
    assert c_in_w == c_in and ks == 1, "only kernel_size=1 is supported"

    n = k * l
    n_valid = b * n
    x3 = x.reshape(b, c_in, n)  # free contiguous reshape: 'b c k l -> b c (k l)'

    # ---- generation-aware tile sizing (v7x: 64 MiB VMEM, v5e/v6e: 128 MiB) ---
    vmem_cap = _vmem_capacity_bytes()
    budget = (vmem_cap * 5) // 8            # ~40 MiB (v7x) / ~80 MiB (v5e/v6e)
    usable = int(budget * 0.85)             # headroom for W/scale/shift/compiler scratch
    itemsize = x.dtype.itemsize
    # double-buffered x tile + double-buffered out tile, per lane column per batch row
    per_col = 2 * c_in * itemsize + 2 * c_out * itemsize
    tile_n_full = pl.cdiv(n, 128) * 128
    cols_fit = max(128, usable // per_col)
    tile_n = min(tile_n_full, (cols_fit // 128) * 128)
    if tile_n >= tile_n_full and b > 1:
        # whole time axis fits per row -> grow the per-step payload over batch,
        # but keep >= 2 batch slices so pass-1's "parallel" axis can use both
        # TensorCores on v7x.
        rows_fit = max(1, usable // (per_col * tile_n))
        tb_cap = max(1, b // 2)
        tb = _largest_divisor_leq(b, min(rows_fit, tb_cap))
    else:
        tb = 1
    n_bslices = b // tb
    n_tiles = pl.cdiv(n, tile_n)
    ragged = (n % tile_n) != 0

    # Deepen x prefetch only when per-step payloads stay small on a long grid.
    x_step_bytes = tb * c_in * tile_n * itemsize
    if x_step_bytes < (512 << 10) and n_tiles >= 4:
        x_pipe = pl.Buffered(3)
    else:
        x_pipe = pl.Buffered(2)
    x_spec = pl.BlockSpec((tb, c_in, tile_n), lambda bi, j: (bi, 0, j),
                          pipeline_mode=x_pipe)

    # ---- Pass 1: per-batch-slice partial x-moments (no pad, masked tail) ----
    sx_part, sxx_part = pl.pallas_call(
        functools.partial(_stats_kernel, n=n, tile_n=tile_n, ragged=ragged),
        out_shape=(jax.ShapeDtypeStruct((n_bslices, c_in, 1), jnp.float32),
                   jax.ShapeDtypeStruct((n_bslices, c_in, c_in), jnp.float32)),
        grid=(n_bslices, n_tiles),
        in_specs=[x_spec],
        out_specs=(pl.BlockSpec((pl.Squeezed(), c_in, 1),
                                lambda bi, j: (bi, 0, 0)),
                   pl.BlockSpec((pl.Squeezed(), c_in, c_in),
                                lambda bi, j: (bi, 0, 0))),
        compiler_params=pltpu.CompilerParams(
            dimension_semantics=("parallel", "arbitrary"),
            vmem_limit_bytes=budget),
    )(x3)

    # ---- tiny (channel-sized) combine + BN-affine fold, in plain jnp --------
    w2 = weight.reshape(c_out, c_in).astype(jnp.float32)
    g2 = gamma.reshape(c_out, 1).astype(jnp.float32)
    be2 = beta.reshape(c_out, 1).astype(jnp.float32)
    sx = jnp.sum(sx_part, axis=0)                         # (c_in, 1)
    sxx = jnp.sum(sxx_part, axis=0)                       # (c_in, c_in)
    inv_n = 1.0 / n_valid
    mean = (w2 @ sx) * inv_n                              # (c_out, 1)
    ey2 = jnp.sum((w2 @ sxx) * w2, axis=1, keepdims=True) * inv_n
    # TODO(synk): E[y^2]-mean^2 can cancel catastrophically when |mean| >> std;
    # clamped to 0 here (matches previous behaviour, fine at unit-scale data).
    var = jnp.maximum(ey2 - mean * mean, 0.0)
    scale = g2 * lax.rsqrt(var + eps)                     # (c_out, 1)
    shift = be2 - mean * scale                            # (c_out, 1)

    w_spec = pl.BlockSpec((c_out, c_in), lambda bi, j: (0, 0))
    vec_spec = pl.BlockSpec((c_out, 1), lambda bi, j: (0, 0))

    # ---- Pass 2: normalize + ReLU, fully parallel grid, no pad / no slice ---
    out3 = pl.pallas_call(
        functools.partial(_norm_kernel, use_act=use_act),
        out_shape=jax.ShapeDtypeStruct((b, c_out, n), x.dtype),
        grid=(n_bslices, n_tiles),
        in_specs=[x_spec, w_spec, vec_spec, vec_spec],
        out_specs=pl.BlockSpec((tb, c_out, tile_n), lambda bi, j: (bi, 0, j)),
        compiler_params=pltpu.CompilerParams(
            dimension_semantics=("parallel", "parallel"),
            vmem_limit_bytes=budget),
    )(x3, w2, scale, shift)

    # free contiguous reshape: 'b c (k l) -> b c k l'
    return out3.reshape(b, c_out, k, l)


def _reference(x, weight, bias, gamma, beta, *, use_act=True, eps=1e-5):
    """Pure-JAX reference mirroring the PyTorch forward (training-mode BN)."""
    b, c_in, k, l = x.shape
    c_out = weight.shape[0]
    h = x.reshape(b, c_in, k * l)
    y = jnp.einsum("oc,bcn->bon", weight.reshape(c_out, c_in), h) \
        + bias[None, :, None]
    mean = jnp.mean(y, axis=(0, 2), keepdims=True)
    var = jnp.mean((y - mean) ** 2, axis=(0, 2), keepdims=True)
    y = (y - mean) / jnp.sqrt(var + eps)
    y = y * gamma[None, :, None] + beta[None, :, None]
    if use_act:
        y = jnp.maximum(y, 0.0)
    return y.reshape(b, c_out, k, l)


def _make_inputs(key, b, c_in, c_out, k, l):
    ks = 1
    k_x, k_w, k_b, k_g, k_be = jax.random.split(key, 5)
    x = jax.random.normal(k_x, (b, c_in, k, l), dtype=jnp.float32)
    # kaiming_normal_ (fan_in, gain=sqrt(2)) on the conv weight
    fan_in = c_in * ks
    w_std = (2.0 / fan_in) ** 0.5
    weight = jax.random.normal(k_w, (c_out, c_in, ks), dtype=jnp.float32) * w_std
    # nn.Conv1d default bias init: U(-1/sqrt(fan_in), 1/sqrt(fan_in))
    bound = 1.0 / (fan_in ** 0.5)
    bias = jax.random.uniform(k_b, (c_out,), dtype=jnp.float32,
                              minval=-bound, maxval=bound)
    # BN affine params (perturbed from ones/zeros to exercise the fold)
    gamma = 1.0 + 0.1 * jax.random.normal(k_g, (c_out,), dtype=jnp.float32)
    beta = 0.1 * jax.random.normal(k_be, (c_out,), dtype=jnp.float32)
    return x, weight, bias, gamma, beta


if __name__ == "__main__":
    key = jax.random.PRNGKey(0)
    k1, k2 = jax.random.split(key)

    # Case 1: lane-aligned time axis (K*L = 256, multiple of 128).
    x, w, bi, g, be = _make_inputs(k1, 2, 4, 8, 16, 16)
    out = jax.block_until_ready(conv1d_block(x, w, bi, g, be, use_act=True))
    ref = _reference(x, w, bi, g, be, use_act=True)
    assert out.shape == (2, 8, 16, 16)
    assert jnp.allclose(out, ref, atol=2e-4, rtol=2e-4), "mismatch (aligned case)"

    # Case 2: ragged time axis (K*L = 91) -> exercises in-kernel lane masking
    # (pass 1) and clipped ragged-block stores (pass 2), no pad/slice copies.
    x, w, bi, g, be = _make_inputs(k2, 2, 4, 8, 13, 7)
    out = jax.block_until_ready(conv1d_block(x, w, bi, g, be, use_act=True))
    ref = _reference(x, w, bi, g, be, use_act=True)
    assert out.shape == (2, 8, 13, 7)
    assert jnp.allclose(out, ref, atol=2e-4, rtol=2e-4), "mismatch (ragged case)"

    print("KERNEL_OK")
</pallas_src>

<mosaic_0001>
module attributes {stable_mosaic.version = 11 : i64} {
  func.func @_stats_kernel(%arg0: i32, %arg1: i32, %arg2: memref<1x4x256xf32, #tpu.memory_space<vmem>>, %arg3: memref<1x4x1xf32, #tpu.memory_space<vmem>>, %arg4: memref<1x4x4xf32, #tpu.memory_space<vmem>>) attributes {dimension_semantics = [#tpu.dimension_semantics<parallel>, #tpu.dimension_semantics<arbitrary>], iteration_bounds = array<i64: 2, 1>, scalar_prefetch = 0 : i64, scratch_operands = 0 : i64, tpu.core_type = #tpu.core_type<tc>, window_params = [{pipeline_mode = #tpu.pipeline_mode<double_buffered>, transform_indices = @transform_0, window_bounds = array<i64: 1, 4, 256>}, {transform_indices = @transform_1, window_bounds = array<i64: 1, 4, 1>}, {transform_indices = @transform_2, window_bounds = array<i64: 1, 4, 4>}]} {
    %c0_i32 = arith.constant 0 : i32
    %0 = arith.cmpi eq, %arg1, %c0_i32 : i32
    %1 = arith.extui %0 : i1 to i32
    %c0_i32_0 = arith.constant 0 : i32
    %2 = arith.cmpi ne, %1, %c0_i32_0 : i32
    scf.if %2 {
      %cst_18 = arith.constant 0.000000e+00 : f32
      %24 = vector.broadcast %cst_18 : f32 to vector<4x1xf32>
      %c0_19 = arith.constant 0 : index
      %c0_20 = arith.constant 0 : index
      %c0_21 = arith.constant 0 : index
      %25 = vector.load %arg3[%c0_19, %c0_20, %c0_21] : memref<1x4x1xf32, #tpu.memory_space<vmem>>, vector<1x4x1xf32>
      %26 = vector.shape_cast %25 : vector<1x4x1xf32> to vector<4x1xf32>
      %27 = vector.shape_cast %24 : vector<4x1xf32> to vector<1x4x1xf32>
      tpu.vector_store %arg3[%c0_19, %c0_20, %c0_21], %27 {strides = array<i32>} : memref<1x4x1xf32, #tpu.memory_space<vmem>>, vector<1x4x1xf32>,
      %cst_22 = arith.constant 0.000000e+00 : f32
      %28 = vector.broadcast %cst_22 : f32 to vector<4x4xf32>
      %c0_23 = arith.constant 0 : index
      %c0_24 = arith.constant 0 : index
      %c0_25 = arith.constant 0 : index
      %29 = vector.load %arg4[%c0_23, %c0_24, %c0_25] : memref<1x4x4xf32, #tpu.memory_space<vmem>>, vector<1x4x4xf32>
      %30 = vector.shape_cast %29 : vector<1x4x4xf32> to vector<4x4xf32>
      %31 = vector.shape_cast %28 : vector<4x4xf32> to vector<1x4x4xf32>
      tpu.vector_store %arg4[%c0_23, %c0_24, %c0_25], %31 {strides = array<i32>} : memref<1x4x4xf32, #tpu.memory_space<vmem>>, vector<1x4x4xf32>,
    } else {
    }
    %cst = arith.constant 0.000000e+00 : f32
    %3 = vector.broadcast %cst : f32 to vector<4x1xf32>
    %cst_1 = arith.constant 0.000000e+00 : f32
    %4 = vector.broadcast %cst_1 : f32 to vector<4x4xf32>
    %c0 = arith.constant 0 : index
    %c0_2 = arith.constant 0 : index
    %c0_3 = arith.constant 0 : index
    %5 = vector.load %arg2[%c0, %c0_2, %c0_3] : memref<1x4x256xf32, #tpu.memory_space<vmem>>, vector<1x4x256xf32>
    %6 = vector.shape_cast %5 : vector<1x4x256xf32> to vector<4x256xf32>
    %cst_4 = arith.constant dense<0.000000e+00> : vector<4xf32>
    %7 = vector.multi_reduction <add>, %6, %cst_4 [1] : vector<4x256xf32> to vector<4xf32>
    %8 = vector.shape_cast %7 : vector<4xf32> to vector<4x1xf32>
    %9 = arith.addf %3, %8 : vector<4x1xf32>
    %cst_5 = arith.constant dense<0.000000e+00> : vector<4x4xf32>
    %10 = tpu.matmul %6, %6, %cst_5 {dimension_numbers = #tpu.dot_dimension_numbers<[1], [1], [0], [0], [0, 0, 1, 0], [], []>} : vector<4x256xf32>, vector<4x256xf32>, vector<4x4xf32> -> vector<4x4xf32>
    %11 = arith.addf %4, %10 : vector<4x4xf32>
    %c0_6 = arith.constant 0 : index
    %c0_7 = arith.constant 0 : index
    %c0_8 = arith.constant 0 : index
    %12 = vector.load %arg3[%c0_6, %c0_7, %c0_8] : memref<1x4x1xf32, #tpu.memory_space<vmem>>, vector<1x4x1xf32>
    %13 = vector.shape_cast %12 : vector<1x4x1xf32> to vector<4x1xf32>
    %14 = arith.addf %13, %9 : vector<4x1xf32>
    %c0_9 = arith.constant 0 : index
    %c0_10 = arith.constant 0 : index
    %c0_11 = arith.constant 0 : index
    %15 = vector.load %arg3[%c0_9, %c0_10, %c0_11] : memref<1x4x1xf32, #tpu.memory_space<vmem>>, vector<1x4x1xf32>
    %16 = vector.shape_cast %15 : vector<1x4x1xf32> to vector<4x1xf32>
    %17 = vector.shape_cast %14 : vector<4x1xf32> to vector<1x4x1xf32>
    tpu.vector_store %arg3[%c0_9, %c0_10, %c0_11], %17 {strides = array<i32>} : memref<1x4x1xf32, #tpu.memory_space<vmem>>, vector<1x4x1xf32>,
    %c0_12 = arith.constant 0 : index
    %c0_13 = arith.constant 0 : index
    %c0_14 = arith.constant 0 : index
    %18 = vector.load %arg4[%c0_12, %c0_13, %c0_14] : memref<1x4x4xf32, #tpu.memory_space<vmem>>, vector<1x4x4xf32>
    %19 = vector.shape_cast %18 : vector<1x4x4xf32> to vector<4x4xf32>
    %20 = arith.addf %19, %11 : vector<4x4xf32>
    %c0_15 = arith.constant 0 : index
    %c0_16 = arith.constant 0 : index
    %c0_17 = arith.constant 0 : index
    %21 = vector.load %arg4[%c0_15, %c0_16, %c0_17] : memref<1x4x4xf32, #tpu.memory_space<vmem>>, vector<1x4x4xf32>
    %22 = vector.shape_cast %21 : vector<1x4x4xf32> to vector<4x4xf32>
    %23 = vector.shape_cast %20 : vector<4x4xf32> to vector<1x4x4xf32>
    tpu.vector_store %arg4[%c0_15, %c0_16, %c0_17], %23 {strides = array<i32>} : memref<1x4x4xf32, #tpu.memory_space<vmem>>, vector<1x4x4xf32>,
    return
  }
  func.func @transform_0(%arg0: i32, %arg1: i32) -> (i32, i32, i32) {
    %c0_i32 = arith.constant 0 : i32
    %c0_i32_0 = arith.constant 0 : i32
    return %arg0, %c0_i32, %arg1 : i32, i32, i32
  }
  func.func @transform_1(%arg0: i32, %arg1: i32) -> (i32, i32, i32) {
    %c0_i32 = arith.constant 0 : i32
    %c0_i32_0 = arith.constant 0 : i32
    %c0_i32_1 = arith.constant 0 : i32
    return %arg0, %c0_i32, %c0_i32_0 : i32, i32, i32
  }
  func.func @transform_2(%arg0: i32, %arg1: i32) -> (i32, i32, i32) {
    %c0_i32 = arith.constant 0 : i32
    %c0_i32_0 = arith.constant 0 : i32
    %c0_i32_1 = arith.constant 0 : i32
    return %arg0, %c0_i32, %c0_i32_0 : i32, i32, i32
  }
}

</mosaic_0001>

<llo_original>
// kernel: tpu_custom_call.1
$region0: #{tpu_custom_call.1}
  #allocation0 [shape = 'u32[]', space=smem, size = 0x4, offset = 0x4, fixed_abs, tag = 'smem constant byte address 0x4 - core index']
  #allocation1 [shape = 'u32[72,128]{1,0:T(1,128)}', space=vmem, size = 0x9000, scoped, tag = 'internal scratch']
  %s0 = inlined_call_operand.hbm [shape: f32[2,4,256], index: 0, kind: input, shape index: {}]
  %s1 = inlined_call_operand.vmem [shape: f32[2,4,1], index: 1, kind: output, shape index: {0}]
  %s2 = inlined_call_operand.hbm [shape: f32[2,4,4], index: 2, kind: output, shape index: {1}]
  %3 = xla_tuple %s1, %s2
  %s4 = sld [smem:[#allocation0]]
  $region53: #{tpu_custom_call.1} parent=0
    _
  %s6 = ssub.s32 1, %s4
  %s7 = scalar_select 0, %s6, %s4
  $region1: #{tpu_custom_call.1} parent=0
    #allocation2 [shape = 'u8[8192]{0}', space=vmem, size = 0x2000, scoped, tag = 'input window, operand 0']
    #allocation3 [shape = 's32[2]{0}', space=sflag, size = 0x8, scoped, tag = 'scoped memory for tpu_custom_call.1']
    #allocation4 [shape = 's32[2]{0}', space=sflag, size = 0x8, scoped, tag = 'scoped memory for tpu_custom_call.1']
    #allocation5 [shape = 'u8[4096]{0}', space=vmem, size = 0x1000, scoped, tag = 'output window, operand 1']
    %8 = vsyncpa [#allocation3], 0
    %s9 = scalar_lea.sflag [#allocation3], 1
    %10 = vsyncpa %s9, 0
    %11 = vsyncpa [#allocation4], 0
    %s12 = scalar_lea.sflag [#allocation4], 1
    %13 = vsyncpa %s12, 0
    loop: start=0, step=1, limit=4
    $region2: #{tpu_custom_call.1} parent=1 // loop_pre_header
      _
    $region3: #{tpu_custom_call.1} parent=1 // loop_header
      %s15 = sphi 0, %s19
      %p16 = scmp.ge.s32.totalorder %s15, 4
      %s22 = sphi 0, %s34
      %s23 = sphi 0, %s30
      %s24 = sphi 0, %s22
      %s25 = sphi 0, %s23
      %s26 = sphi 0, %s24
      %s27 = sphi 0, %s25
      %s39 = sphi 0, %s41
      %s42 = sphi 0, %s39
      %s43 = sphi 0, %s42
      %s59 = sphi 0, %s43
      %s65 = sphi 0, %s67
      %s68 = sphi 0, %s65
      %s69 = sphi 0, %s68
      %s85 = sphi 0, %s69
      %s91 = sphi 0, %s93
      %s94 = sphi 0, %s91
      %s95 = sphi 0, %s94
      %s111 = sphi 0, %s95
    $region4: #{tpu_custom_call.1} parent=1 // loop_header_branch
      %18 = sbr.rel (%p16) target = $region8
    $region5: #{tpu_custom_call.1} parent=1 // loop_body
      %s20 = ssub.s32 %s15, 1
      %s21 = ssub.s32 %s15, 2
      %s28 = sadd.s32 1, %s23
      %p29 = scmp.ge.s32.totalorder %s28, 1
      %s30 = scalar_select %p29, 0, %s28
      %s31 = sadd.s32 1, %s22
      %s32 = scalar_select %p29, %s31, %s22
      %p33 = scmp.ge.s32.totalorder %s32, 2
      %s34 = scalar_select %p33, 0, %s32
      %s35 = ssub.s32 %s22, %s34
      %s36 = ssub.s32 %s23, %s30
      %s37 = sor.u32 %s35, %s36
      %p38 = scmp.eq.s32.totalorder %s37, 0
      %s40 = sadd.s32 %s39, 1
      %s41 = scalar_select %p38, %s39, %s40
      %p44 = pneg %p38
      %p45 = scmp.eq.s32.totalorder %s15, 1
      %p46 = por %p44, %p45
      %p47 = scmp.ne.s32.totalorder %s39, %s42
      %p48 = scmp.eq.s32.totalorder %s15, 0
      %p49 = por %p47, %p48
      %p50 = scmp.ne.s32.totalorder %s39, %s42
      %p51 = scmp.eq.s32.totalorder %s20, 1
      %p52 = por %p50, %p51
      %p53 = scmp.ne.s32.totalorder %s42, %s43
      %p54 = scmp.eq.s32.totalorder %s20, 0
      %p55 = por %p53, %p54
      %p56 = scmp.ne.s32.totalorder %s42, %s43
      %p57 = scmp.eq.s32.totalorder %s21, 1
      %p58 = por %p56, %p57
      %p60 = scmp.ne.s32.totalorder %s43, %s59
      %p61 = scmp.eq.s32.totalorder %s21, 0
      %p62 = por %p60, %p61
      %s63 = ssub.s32 %s22, %s34
      %p64 = scmp.eq.s32.totalorder %s63, 0
      %s66 = sadd.s32 %s65, 1
      %s67 = scalar_select %p64, %s65, %s66
      %p70 = pneg %p64
      %p71 = scmp.eq.s32.totalorder %s15, 1
      %p72 = por %p70, %p71
      %p73 = scmp.ne.s32.totalorder %s65, %s68
      %p74 = scmp.eq.s32.totalorder %s15, 0
      %p75 = por %p73, %p74
      %p76 = scmp.ne.s32.totalorder %s65, %s68
      %p77 = scmp.eq.s32.totalorder %s20, 1
      %p78 = por %p76, %p77
      %p79 = scmp.ne.s32.totalorder %s68, %s69
      %p80 = scmp.eq.s32.totalorder %s20, 0
      %p81 = por %p79, %p80
      %p82 = scmp.ne.s32.totalorder %s68, %s69
      %p83 = scmp.eq.s32.totalorder %s21, 1
      %p84 = por %p82, %p83
      %p86 = scmp.ne.s32.totalorder %s69, %s85
      %p87 = scmp.eq.s32.totalorder %s21, 0
      %p88 = por %p86, %p87
      %s89 = ssub.s32 %s22, %s34
      %p90 = scmp.eq.s32.totalorder %s89, 0
      %s92 = sadd.s32 %s91, 1
      %s93 = scalar_select %p90, %s91, %s92
      %p96 = pneg %p90
      %p97 = scmp.eq.s32.totalorder %s15, 1
      %p98 = por %p96, %p97
      %p99 = scmp.ne.s32.totalorder %s91, %s94
      %p100 = scmp.eq.s32.totalorder %s15, 0
      %p101 = por %p99, %p100
      %p102 = scmp.ne.s32.totalorder %s91, %s94
      %p103 = scmp.eq.s32.totalorder %s20, 1
      %p104 = por %p102, %p103
      %p105 = scmp.ne.s32.totalorder %s94, %s95
      %p106 = scmp.eq.s32.totalorder %s20, 0
      %p107 = por %p105, %p106
      %p108 = scmp.ne.s32.totalorder %s94, %s95
      %p109 = scmp.eq.s32.totalorder %s21, 1
      %p110 = por %p108, %p109
      %p112 = scmp.ne.s32.totalorder %s95, %s111
      %p113 = scmp.eq.s32.totalorder %s21, 0
      %p114 = por %p112, %p113
      %p115 = scmp.le.s32.totalorder 1, %s15
      %p116 = scmp.lt.s32.totalorder %s15, 3
      %p117 = pnand %p115, %p116
      %p118 = pneg %p117
      // Predicated region
      $region9: #{tpu_custom_call.1} parent=5 // pred_check
        _
      $region10: #{tpu_custom_call.1} parent=5 // pred_check_branch
        %120 = sbr.rel (%p117) target = $region12
      $region11: #{tpu_custom_call.1} parent=5 // pred_region
        %s121 = ssub.s32 %s15, 1
      $region12: #{tpu_custom_call.1} parent=5 // pred_fallthru
        _
      %p122 = scmp.lt.s32.totalorder %s15, 2
      // Predicated region
      $region13: #{tpu_custom_call.1} parent=5 // pred_check
        %p123 = pneg %p122
      $region14: #{tpu_custom_call.1} parent=5 // pred_check_branch
        %125 = sbr.rel (%p123) target = $region16
      $region15: #{tpu_custom_call.1} parent=5 // pred_region
        // Predicated region
        $region17: #{tpu_custom_call.1} parent=15 // pred_check
          %p126 = pneg %p49
        $region18: #{tpu_custom_call.1} parent=15 // pred_check_branch
          %128 = sbr.rel (%p126) target = $region20
        $region19: #{tpu_custom_call.1} parent=15 // pred_region
          %s129 = sand.u32 %s39, 1
          %s130 = scalar_lea.sflag [#allocation3], %s129
          %s131 = sand.u32 %s39, 1
          %s132 = smul.addr %s131, 8
          %s133 = scalar_lea.vmem [#allocation2], %s132
          %s134 = smul.u32 2, %s23
          %136 = vsyncadd %s130, 0
          %s137 = smul.addr %s22, 2
          %s138 = sadd.s32 %s134, %s137
          %s139 = smul.addr %s138, 4
          %s140 = scalar_lea.hbm %s0, %s139
          %s142 = sshll.u32 %s140, 4
          %s143 = int_to_ptr.hbm [resolvable:$true] %s142
          %s144 = sshll.u32 %s133, 4
          %s145 = int_to_ptr.vmem [resolvable:$true] %s144
          %147 = dma.hbm_to_vmem [thread:$0]  %s143, 128, %s145, %s130
        $region20: #{tpu_custom_call.1} parent=15 // pred_fallthru
          _
      $region16: #{tpu_custom_call.1} parent=5 // pred_fallthru
        _
      %p148 = scmp.le.s32.totalorder 1, %s15
      %p149 = scmp.lt.s32.totalorder %s15, 3
      %p150 = pnand %p148, %p149
      %p151 = pneg %p150
      // Predicated region
      $region21: #{tpu_custom_call.1} parent=5 // pred_check
        _
      $region22: #{tpu_custom_call.1} parent=5 // pred_check_branch
        %153 = sbr.rel (%p150) target = $region24
      $region23: #{tpu_custom_call.1} parent=5 // pred_region
        %s154 = ssub.s32 %s15, 1
        %s155 = sand.u32 %s42, 1
        %s156 = scalar_lea.sflag [#allocation3], %s155
        %s157 = sand.u32 %s42, 1
        %s158 = smul.addr %s157, 8
        %s159 = scalar_lea.vmem [#allocation2], %s158
        // Predicated region
        $region25: #{tpu_custom_call.1} parent=23 // pred_check
          %p160 = pneg %p55
        $region26: #{tpu_custom_call.1} parent=23 // pred_check_branch
          %162 = sbr.rel (%p160) target = $region28
        $region27: #{tpu_custom_call.1} parent=23 // pred_region
          %164 = dma.done %s156, 128
        $region28: #{tpu_custom_call.1} parent=23 // pred_fallthru
          _
        %s165 = sand.u32 %s42, 1
        %s166 = scalar_lea.sflag [#allocation3], %s165
        %s167 = sand.u32 %s42, 1
        %s168 = smul.addr %s167, 8
        %s169 = scalar_lea.vmem [#allocation2], %s168
        %p170 = pneg %p55
        %p171 = pneg %p52
        %p172 = pneg %p81
        %p173 = pneg %p78
        %p174 = scmp.lt.s32.totalorder %s24, 1
        %s175 = scalar_select %p174, %s24, 1
        %s176 = smul.addr %s175, 4
        %s177 = scalar_lea.vmem %s1, %s176
        %p178 = pneg %p107
        %p179 = pneg %p104
        %s180 = sand.u32 %s94, 1
        %s181 = scalar_lea.sflag [#allocation4], %s180
        %s182 = sand.u32 %s94, 1
        %s183 = smul.addr %s182, 4
        %s184 = scalar_lea.vmem [#allocation5], %s183
        %s185 = smul.u32 2, %s25
        %p186 = scmp.lt.s32.totalorder %s24, 1
        %s187 = scalar_select %p186, %s24, 1
        %s188 = smul.addr %s187, 4
        %s189 = scalar_lea.vmem %s1, %s188
        %p190 = scmp.eq.s32.totalorder %s25, 0
        // Predicated region
        $region29: #{tpu_custom_call.1} parent=23 // pred_check
          %p191 = pneg %p190
        $region30: #{tpu_custom_call.1} parent=23 // pred_check_branch
          %193 = sbr.rel (%p191) target = $region32
        $region31: #{tpu_custom_call.1} parent=23 // pred_region
          %vm194 = vcmask 3072
          %195 = vst.msk [vmem:[%s189] sm:$0xf] %vm194, 0.0
          %vm196 = vcmask 27648
          %197 = vst.msk [vmem:[%s184] sm:$0xf] %vm196, 0.0
        $region32: #{tpu_custom_call.1} parent=23 // pred_fallthru
          _
        %v198 = vld [vmem:[%s159] sm:$0xff]
        %200 = vst [vmem:[#allocation1] ss:$2 sm:$0xff] %v198
        %v201 = vld.sshfl [vmem:[#allocation1] sm:$0xff pattern:$0x75316420]
        %v202 = vld.sshfl [vmem:[#allocation1 + $0x8] sm:$0xff pattern:$0x75316420]
        %vm205 = vcmask 1043456
        %v206 = vsel %vm205, %v201, 0.0
        %v207 = vsel %vm205, %v202, 0.0
        %v208 = vadd.f32 %v206, %v207
        %209 = vadd.xlane.f32.xlu0 %v208
        %v210 = vpop.xlane.xlu0 %209
        %v211 = vadd.f32 %v210, 0.0
        %212 = vst [vmem:[#allocation1] ss:$2 sm:$0xff] %v198
        %v213 = vld.sshfl [vmem:[#allocation1] sm:$0xff pattern:$0x75316420]
        %v214 = vld.sshfl [vmem:[#allocation1 + $0x8] sm:$0xff pattern:$0x75316420]
        %217 = vst [vmem:[#allocation1] ss:$2 sm:$0xff] %v198
        %v218 = vld.sshfl [vmem:[#allocation1] sm:$0xff pattern:$0x75316420]
        %v219 = vld.sshfl [vmem:[#allocation1 + $0x8] sm:$0xff pattern:$0x75316420]
        %222 = vmatpush.xpose.msra.mxu0 0.0
        %223 = vmatpush.xpose.msra.mxu0 0.0
        %224 = vmatpush.xpose.msra.mxu0 0.0
        %225 = vmatpush.xpose.msra.mxu0 0.0
        %226 = vmatpush.xpose.msra.mxu0 0.0
        %227 = vmatpush.xpose.msra.mxu0 0.0
        %228 = vmatpush.xpose.msra.mxu0 0.0
        %229 = vmatpush.xpose.msra.mxu0 0.0
        %230 = vmatpush.xpose.msra.mxu0 0.0
        %231 = vmatpush.xpose.msra.mxu0 0.0
        %232 = vmatpush.xpose.msra.mxu0 0.0
        %233 = vmatpush.xpose.msra.mxu0 0.0
        %234 = vmatpush.xpose.msra.mxu0 0.0
        %235 = vmatpush.xpose.msra.mxu0 0.0
        %236 = vmatpush.xpose.msra.mxu0 0.0
        %237 = vmatpush.xpose.msra.mxu0 %v218
        %238 = vmatmul.f32.gmra.mxu0 %v213
        %v239 = vpop.f32.mrf.mxu0
        %v240 = vadd.f32 0.0, %v239
        %241 = vdwg.mxu0
        %242 = vmatpush.xpose.msra.mxu0 0.0
        %243 = vmatpush.xpose.msra.mxu0 0.0
        %244 = vmatpush.xpose.msra.mxu0 0.0
        %245 = vmatpush.xpose.msra.mxu0 0.0
        %246 = vmatpush.xpose.msra.mxu0 0.0
        %247 = vmatpush.xpose.msra.mxu0 0.0
        %248 = vmatpush.xpose.msra.mxu0 0.0
        %249 = vmatpush.xpose.msra.mxu0 0.0
        %250 = vmatpush.xpose.msra.mxu0 0.0
        %251 = vmatpush.xpose.msra.mxu0 0.0
        %252 = vmatpush.xpose.msra.mxu0 0.0
        %253 = vmatpush.xpose.msra.mxu0 0.0
        %254 = vmatpush.xpose.msra.mxu0 0.0
        %255 = vmatpush.xpose.msra.mxu0 0.0
        %256 = vmatpush.xpose.msra.mxu0 0.0
        %257 = vmatpush.xpose.msra.mxu0 %v219
        %258 = vmatmul.f32.gmra.mxu0 %v214
        %v259 = vpop.f32.mrf.mxu0
        %v260 = vadd.f32 %v240, %v259
        %261 = vdwg.mxu0
        %v262 = vld [vmem:[%s189] sm:$0xf]
        %v263 = vadd.f32 %v262, %v211
        %vm264 = vcmask 3072
        %265 = vst.msk [vmem:[%s189] sm:$0xf] %vm264, %v263
        %v266 = vld [vmem:[%s184] sm:$0xf]
        %v267 = vadd.f32 %v266, %v260
        %vm268 = vcmask 27648
        %269 = vst.msk [vmem:[%s184] sm:$0xf] %vm268, %v267
        %p270 = scmp.lt.s32.totalorder %s24, 1
        %s271 = scalar_select %p270, %s24, 1
        %s272 = smul.addr %s271, 4
        %s273 = scalar_lea.vmem %s1, %s272
        %s274 = sand.u32 %s94, 1
        %s275 = scalar_lea.sflag [#allocation4], %s274
        %s276 = sand.u32 %s94, 1
        %s277 = smul.addr %s276, 4
        %s278 = scalar_lea.vmem [#allocation5], %s277
        // Predicated region
        $region33: #{tpu_custom_call.1} parent=23 // pred_check
          %p279 = pneg %p78
        $region34: #{tpu_custom_call.1} parent=23 // pred_check_branch
          %281 = sbr.rel (%p279) target = $region36
        $region35: #{tpu_custom_call.1} parent=23 // pred_region
          _
        $region36: #{tpu_custom_call.1} parent=23 // pred_fallthru
          _
        // Predicated region
        $region37: #{tpu_custom_call.1} parent=23 // pred_check
          %p282 = pneg %p104
        $region38: #{tpu_custom_call.1} parent=23 // pred_check_branch
          %284 = sbr.rel (%p282) target = $region40
        $region39: #{tpu_custom_call.1} parent=23 // pred_region
          %286 = vsyncadd %s275, 0
          %s287 = smul.addr %s24, 4
          %s288 = scalar_lea.hbm %s2, %s287
          %s290 = sshll.u32 %s278, 4
          %s291 = int_to_ptr.vmem [resolvable:$true] %s290
          %s292 = sshll.u32 %s288, 4
          %s293 = int_to_ptr.hbm [resolvable:$true] %s292
          %295 = dma.vmem_to_hbm [thread:$0]  %s291, 64, %s293, %s275
        $region40: #{tpu_custom_call.1} parent=23 // pred_fallthru
          _
      $region24: #{tpu_custom_call.1} parent=5 // pred_fallthru
        _
      %p296 = scmp.le.s32.totalorder 2, %s15
      // Predicated region
      $region41: #{tpu_custom_call.1} parent=5 // pred_check
        %p297 = pneg %p296
      $region42: #{tpu_custom_call.1} parent=5 // pred_check_branch
        %299 = sbr.rel (%p297) target = $region44
      $region43: #{tpu_custom_call.1} parent=5 // pred_region
        %s300 = ssub.s32 %s15, 2
        // Predicated region
        $region45: #{tpu_custom_call.1} parent=43 // pred_check
          %p301 = pneg %p84
        $region46: #{tpu_custom_call.1} parent=43 // pred_check_branch
          %303 = sbr.rel (%p301) target = $region48
        $region47: #{tpu_custom_call.1} parent=43 // pred_region
          %p304 = scmp.lt.s32.totalorder %s26, 1
          %s305 = scalar_select %p304, %s26, 1
          %s306 = smul.addr %s305, 4
          %s307 = scalar_lea.vmem %s1, %s306
        $region48: #{tpu_custom_call.1} parent=43 // pred_fallthru
          _
        // Predicated region
        $region49: #{tpu_custom_call.1} parent=43 // pred_check
          %p308 = pneg %p110
        $region50: #{tpu_custom_call.1} parent=43 // pred_check_branch
          %310 = sbr.rel (%p308) target = $region52
        $region51: #{tpu_custom_call.1} parent=43 // pred_region
          %s311 = sand.u32 %s95, 1
          %s312 = scalar_lea.sflag [#allocation4], %s311
          %s313 = sand.u32 %s95, 1
          %s314 = smul.addr %s313, 4
          %s315 = scalar_lea.vmem [#allocation5], %s314
          %317 = dma.done %s312, 64
        $region52: #{tpu_custom_call.1} parent=43 // pred_fallthru
          _
      $region44: #{tpu_custom_call.1} parent=5 // pred_fallthru
        _
    $region6: #{tpu_custom_call.1} parent=1 // loop_footer
      %s19 = sadd.s32 1, %s15
    $region7: #{tpu_custom_call.1} parent=1 // loop_footer_branch
      %14 = sbr.rel target = $region3
    $region8: #{tpu_custom_call.1} parent=1 // loop_exit
      _
    %318 = vsyncpa [#allocation3], 1
    %s319 = scalar_lea.sflag [#allocation3], 1
    %320 = vsyncpa %s319, 1
    %321 = vsyncpa [#allocation4], 1
    %s322 = scalar_lea.sflag [#allocation4], 1
    %323 = vsyncpa %s322, 1

</llo_original>
